<compile_context>
chip_gen: v7x
topology: tpu7x:2x2x1
jax: 0.10.0
libtpu: 0.0.40
codegen_flags: <defaults>
</compile_context>

<pallas_src>
import functools

import jax
import jax.numpy as jnp
from jax.experimental import pallas as pl
from jax.experimental.pallas import tpu as pltpu

LANE = 128
SUBLANE = 8


def _round_up(x, m):
    return (x + m - 1) // m * m


def _vmem_cap_bytes():
    try:
        return int(pltpu.get_tpu_info().vmem_capacity_bytes)
    except Exception:
        return 64 * 1024 * 1024  # conservative (v7x per-TC physical VMEM)


# ------------------------------ fused kernel ---------------------------------

def _fused_kernel(x_ref, w_ref, wres_ref, b_ref, o_ref, *, layer_meta, out_meta):
    """Entire ResidualNetwork forward for one [block_n, din0_pad] row tile.

    x_ref    : [block_n, din0_pad]            f32 activation row tile
    w_ref    : [d_max_pad, main_cols]         bf16: per-layer W blocks + fc_out W,
                                              column-concatenated (static offsets)
    wres_ref : [d_max_pad, res_cols]          bf16: projection-layer W_res blocks only
    b_ref    : [round_up(L+1,8), bias_cols]   f32 biases, layer on the sublane axis
                                              (row L = fc_out bias)
    o_ref    : [block_n, out_pad]             f32 output row tile

    layer_meta: tuple of (din_pad, dout_pad, w_col_off, res_col_off_or_None)
    out_meta  : (din_pad, out_pad, w_col_off) for fc_out
    """
    fea = x_ref[...]                                          # f32 [block_n, din0_pad]
    for l, (din, dout, w_off, r_off) in enumerate(layer_meta):  # static unroll (L small)
        fea_b = fea.astype(jnp.bfloat16)                      # bf16 operand for MXU
        h = jnp.dot(fea_b, w_ref[0:din, w_off:w_off + dout],
                    preferred_element_type=jnp.float32)
        h = jnp.maximum(h + b_ref[l:l + 1, 0:dout], 0.0)      # f32 epilogue
        if r_off is None:
            fea = h + fea                                     # nn.Identity residual
        else:
            fea = h + jnp.dot(fea_b, wres_ref[0:din, r_off:r_off + dout],
                              preferred_element_type=jnp.float32)
    din, dout, w_off = out_meta
    o_ref[...] = (
        jnp.dot(fea.astype(jnp.bfloat16), w_ref[0:din, w_off:w_off + dout],
                preferred_element_type=jnp.float32)
        + b_ref[len(layer_meta):len(layer_meta) + 1, 0:dout]
    )


# ------------------------------ forward wrapper -------------------------------

@functools.partial(
    jax.jit,
    static_argnames=("layer_meta", "out_meta", "d_in0_pad", "out_pad",
                     "output_dim", "block_cap"))
def residual_network_forward(x, w_main, w_res, b_stack, *, layer_meta, out_meta,
                             d_in0_pad, out_pad, output_dim, block_cap=2048):
    n, din = x.shape
    d_max_pad, main_cols = w_main.shape
    res_cols = w_res.shape[1]
    bias_rows, bias_cols = b_stack.shape

    # --- row tiling: big tiles to amortize per-step overhead, but keep >=2 grid
    # steps for mid-sized batches so "parallel" shards across v7x's 2 TCs.
    n_r = _round_up(max(n, SUBLANE), SUBLANE)
    block_n = min(block_cap, n_r)
    if SUBLANE < n_r <= block_cap:
        block_n = _round_up(-(-n_r // 2), SUBLANE)
    n_pad = _round_up(n_r, block_n)

    # Zero-pad activations once (padded rows/cols stay exactly zero through all
    # layers because padded weight rows/cols and biases are zero).
    x_pad = jnp.zeros((n_pad, d_in0_pad), jnp.float32).at[:n, :din].set(
        x.astype(jnp.float32))

    # --- VMEM budget: weights/biases (double-buffered by the pipeline), I/O row
    # tiles (double-buffered), plus headroom for live f32/bf16 intermediates.
    weight_bytes = 2 * ((w_main.size + w_res.size) * 2 + b_stack.size * 4)
    io_bytes = 2 * block_n * (d_in0_pad + out_pad) * 4
    act_bytes = 6 * block_n * d_max_pad * 4
    needed = weight_bytes + io_bytes + act_bytes + (8 << 20)
    vmem_limit = min(max(32 << 20, needed), int(_vmem_cap_bytes() * 0.9))

    kernel = functools.partial(_fused_kernel, layer_meta=layer_meta, out_meta=out_meta)

    out = pl.pallas_call(
        kernel,
        out_shape=jax.ShapeDtypeStruct((n_pad, out_pad), jnp.float32),
        grid_spec=pltpu.PrefetchScalarGridSpec(
            num_scalar_prefetch=0,
            grid=(n_pad // block_n,),
            in_specs=[
                # Row tile of the activation (pipelined over the grid).
                pl.BlockSpec((block_n, d_in0_pad), lambda i: (i, 0)),
                # Weights / biases: constant block index -> VMEM-resident.
                pl.BlockSpec((d_max_pad, main_cols), lambda i: (0, 0)),
                pl.BlockSpec((d_max_pad, res_cols), lambda i: (0, 0)),
                pl.BlockSpec((bias_rows, bias_cols), lambda i: (0, 0)),
            ],
            out_specs=pl.BlockSpec((block_n, out_pad), lambda i: (i, 0)),
        ),
        compiler_params=pltpu.CompilerParams(
            dimension_semantics=("parallel",),
            vmem_limit_bytes=int(vmem_limit),
        ),
    )(x_pad, w_main, w_res, b_stack)

    return out[:n, :output_dim]


# ------------------------------ params / packing ------------------------------

def init_params(key, input_dim, output_dim, hidden_layer_dims):
    """Deterministic init mirroring nn.Linear default (uniform +-1/sqrt(fan_in))."""
    dims = [input_dim] + list(hidden_layer_dims)
    layers = []
    for i in range(len(dims) - 1):
        din, dout = dims[i], dims[i + 1]
        key, kw, kb, kr = jax.random.split(key, 4)
        bound = 1.0 / (din ** 0.5)
        w = jax.random.uniform(kw, (din, dout), jnp.float32, -bound, bound)
        b = jax.random.uniform(kb, (1, dout), jnp.float32, -bound, bound)
        if din != dout:
            w_res = jax.random.uniform(kr, (din, dout), jnp.float32, -bound, bound)
        else:
            w_res = None  # nn.Identity()
        layers.append((w, b, w_res))
    key, kw, kb = jax.random.split(key, 3)
    bound = 1.0 / (dims[-1] ** 0.5)
    w_out = jax.random.uniform(kw, (dims[-1], output_dim), jnp.float32, -bound, bound)
    b_out = jax.random.uniform(kb, (1, output_dim), jnp.float32, -bound, bound)
    return layers, (w_out, b_out)


def pack_params(layers, out_params):
    """Per-layer lane padding, bf16 weight slabs, sublane-dense f32 bias stack."""
    w_out, b_out = out_params
    output_dim = w_out.shape[1]
    L = len(layers)

    pads = [(_round_up(w.shape[0], LANE), _round_up(w.shape[1], LANE))
            for (w, _, _) in layers]
    d_in0_pad = pads[0][0]
    d_last_pad = _round_up(w_out.shape[0], LANE)
    out_pad = _round_up(output_dim, LANE)
    d_max_pad = max([p for pr in pads for p in pr] + [d_last_pad])

    # Main weight slab: per-layer W blocks + fc_out W, concatenated along columns.
    main_cols = sum(p[1] for p in pads) + out_pad
    w_main = jnp.zeros((d_max_pad, main_cols), jnp.float32)
    layer_meta, res_blocks = [], []
    off, r_off = 0, 0
    for (w, b, w_res), (din_p, dout_p) in zip(layers, pads):
        din, dout = w.shape
        w_main = w_main.at[:din, off:off + dout].set(w)
        if w_res is None:
            layer_meta.append((din_p, dout_p, off, None))
        else:
            layer_meta.append((din_p, dout_p, off, r_off))
            res_blocks.append((w_res, r_off))
            r_off += dout_p
        off += dout_p
    w_main = w_main.at[:w_out.shape[0], off:off + output_dim].set(w_out)
    out_meta = (d_last_pad, out_pad, off)

    # Residual slab: projection layers only (no dead zero blocks for Identity).
    res_cols = max(r_off, LANE)
    w_res_all = jnp.zeros((d_max_pad, res_cols), jnp.float32)
    for w_res, roff in res_blocks:
        din, dout = w_res.shape
        w_res_all = w_res_all.at[:din, roff:roff + dout].set(w_res)

    # Bias stack: layer index on the sublane axis; row L holds fc_out bias.
    bias_cols = max([p[1] for p in pads] + [out_pad])
    bias_rows = _round_up(L + 1, SUBLANE)
    b_stack = jnp.zeros((bias_rows, bias_cols), jnp.float32)
    for l, (w, b, w_res) in enumerate(layers):
        b_stack = b_stack.at[l, :b.shape[1]].set(b[0])
    b_stack = b_stack.at[L, :output_dim].set(b_out[0])

    packed = (w_main.astype(jnp.bfloat16), w_res_all.astype(jnp.bfloat16), b_stack)
    meta = dict(layer_meta=tuple(layer_meta), out_meta=out_meta,
                d_in0_pad=d_in0_pad, out_pad=out_pad, output_dim=output_dim)
    return packed, meta


# ------------------------------ pure-JAX reference ----------------------------

def residual_network_reference(x, layers, out_params):
    fea = x
    for (w, b, w_res) in layers:
        h = jnp.maximum(fea @ w + b, 0.0)
        r = fea if w_res is None else fea @ w_res
        fea = h + r
    w_out, b_out = out_params
    return fea @ w_out + b_out


# ------------------------------------ main ------------------------------------

if __name__ == "__main__":
    key = jax.random.PRNGKey(0)

    batch = 8
    input_dim = 32
    hidden_layer_dims = [64, 64, 32]   # first & last blocks use a projection res_fc,
    output_dim = 8                     # middle block uses nn.Identity.

    k_params, k_x = jax.random.split(key)
    layers, out_params = init_params(k_params, input_dim, output_dim, hidden_layer_dims)
    x = jax.random.normal(k_x, (batch, input_dim), jnp.float32)

    (w_main, w_res_all, b_stack), meta = pack_params(layers, out_params)

    y = residual_network_forward(
        x, w_main, w_res_all, b_stack,
        layer_meta=meta["layer_meta"], out_meta=meta["out_meta"],
        d_in0_pad=meta["d_in0_pad"], out_pad=meta["out_pad"],
        output_dim=meta["output_dim"])
    y = jax.block_until_ready(y)

    y_ref = residual_network_reference(x, layers, out_params)
    assert y.shape == (batch, output_dim)
    # bf16 matmul operands with f32 accumulation -> loosened tolerance vs f32 ref.
    assert jnp.allclose(y, y_ref, atol=5e-2, rtol=5e-2), float(
        jnp.max(jnp.abs(y - y_ref)))

    print("KERNEL_OK")
</pallas_src>

<mosaic_0001>
module attributes {stable_mosaic.version = 11 : i64} {
  func.func @_fused_kernel(%arg0: i32, %arg1: memref<8x128xf32, #tpu.memory_space<vmem>>, %arg2: memref<128x512xbf16, #tpu.memory_space<vmem>>, %arg3: memref<128x256xbf16, #tpu.memory_space<vmem>>, %arg4: memref<8x128xf32, #tpu.memory_space<vmem>>, %arg5: memref<8x128xf32, #tpu.memory_space<vmem>>) attributes {dimension_semantics = [#tpu.dimension_semantics<parallel>], iteration_bounds = array<i64: 1>, scalar_prefetch = 0 : i64, scratch_operands = 0 : i64, tpu.core_type = #tpu.core_type<tc>, window_params = [{transform_indices = @transform_0, window_bounds = array<i64: 8, 128>}, {pipeline_mode = #tpu.pipeline_mode<synchronous>, transform_indices = @transform_1, window_bounds = array<i64: 128, 512>}, {pipeline_mode = #tpu.pipeline_mode<synchronous>, transform_indices = @transform_2, window_bounds = array<i64: 128, 256>}, {pipeline_mode = #tpu.pipeline_mode<synchronous>, transform_indices = @transform_3, window_bounds = array<i64: 8, 128>}, {transform_indices = @transform_4, window_bounds = array<i64: 8, 128>}]} {
    %c0 = arith.constant 0 : index
    %c0_0 = arith.constant 0 : index
    %0 = vector.load %arg1[%c0, %c0_0] : memref<8x128xf32, #tpu.memory_space<vmem>>, vector<8x128xf32>
    %1 = arith.truncf %0 : vector<8x128xf32> to vector<8x128xbf16>
    %c0_1 = arith.constant 0 : index
    %c0_2 = arith.constant 0 : index
    %2 = vector.load %arg2[%c0_1, %c0_2] : memref<128x512xbf16, #tpu.memory_space<vmem>>, vector<128x128xbf16>
    %cst = arith.constant dense<0.000000e+00> : vector<8x128xf32>
    %3 = tpu.matmul %1, %2, %cst {dimension_numbers = #tpu.dot_dimension_numbers<[1], [0], [0], [1], [0, 0, 1, 1], [], []>} : vector<8x128xbf16>, vector<128x128xbf16>, vector<8x128xf32> -> vector<8x128xf32>
    %c0_3 = arith.constant 0 : index
    %c0_4 = arith.constant 0 : index
    %4 = vector.load %arg4[%c0_3, %c0_4] : memref<8x128xf32, #tpu.memory_space<vmem>>, vector<1x128xf32>
    %5 = vector.broadcast %4 : vector<1x128xf32> to vector<8x128xf32>
    %6 = arith.addf %3, %5 : vector<8x128xf32>
    %cst_5 = arith.constant 0.000000e+00 : f32
    %7 = vector.broadcast %cst_5 : f32 to vector<8x128xf32>
    %8 = arith.maximumf %6, %7 : vector<8x128xf32>
    %c0_6 = arith.constant 0 : index
    %c0_7 = arith.constant 0 : index
    %9 = vector.load %arg3[%c0_6, %c0_7] : memref<128x256xbf16, #tpu.memory_space<vmem>>, vector<128x128xbf16>
    %cst_8 = arith.constant dense<0.000000e+00> : vector<8x128xf32>
    %10 = tpu.matmul %1, %9, %cst_8 {dimension_numbers = #tpu.dot_dimension_numbers<[1], [0], [0], [1], [0, 0, 1, 1], [], []>} : vector<8x128xbf16>, vector<128x128xbf16>, vector<8x128xf32> -> vector<8x128xf32>
    %11 = arith.addf %8, %10 : vector<8x128xf32>
    %12 = arith.truncf %11 : vector<8x128xf32> to vector<8x128xbf16>
    %c0_9 = arith.constant 0 : index
    %c128 = arith.constant 128 : index
    %13 = vector.load %arg2[%c0_9, %c128] : memref<128x512xbf16, #tpu.memory_space<vmem>>, vector<128x128xbf16>
    %cst_10 = arith.constant dense<0.000000e+00> : vector<8x128xf32>
    %14 = tpu.matmul %12, %13, %cst_10 {dimension_numbers = #tpu.dot_dimension_numbers<[1], [0], [0], [1], [0, 0, 1, 1], [], []>} : vector<8x128xbf16>, vector<128x128xbf16>, vector<8x128xf32> -> vector<8x128xf32>
    %c1 = arith.constant 1 : index
    %c0_11 = arith.constant 0 : index
    %15 = vector.load %arg4[%c1, %c0_11] : memref<8x128xf32, #tpu.memory_space<vmem>>, vector<1x128xf32>
    %16 = vector.broadcast %15 : vector<1x128xf32> to vector<8x128xf32>
    %17 = arith.addf %14, %16 : vector<8x128xf32>
    %cst_12 = arith.constant 0.000000e+00 : f32
    %18 = vector.broadcast %cst_12 : f32 to vector<8x128xf32>
    %19 = arith.maximumf %17, %18 : vector<8x128xf32>
    %20 = arith.addf %19, %11 : vector<8x128xf32>
    %21 = arith.truncf %20 : vector<8x128xf32> to vector<8x128xbf16>
    %c0_13 = arith.constant 0 : index
    %c256 = arith.constant 256 : index
    %22 = vector.load %arg2[%c0_13, %c256] : memref<128x512xbf16, #tpu.memory_space<vmem>>, vector<128x128xbf16>
    %cst_14 = arith.constant dense<0.000000e+00> : vector<8x128xf32>
    %23 = tpu.matmul %21, %22, %cst_14 {dimension_numbers = #tpu.dot_dimension_numbers<[1], [0], [0], [1], [0, 0, 1, 1], [], []>} : vector<8x128xbf16>, vector<128x128xbf16>, vector<8x128xf32> -> vector<8x128xf32>
    %c2 = arith.constant 2 : index
    %c0_15 = arith.constant 0 : index
    %24 = vector.load %arg4[%c2, %c0_15] : memref<8x128xf32, #tpu.memory_space<vmem>>, vector<1x128xf32>
    %25 = vector.broadcast %24 : vector<1x128xf32> to vector<8x128xf32>
    %26 = arith.addf %23, %25 : vector<8x128xf32>
    %cst_16 = arith.constant 0.000000e+00 : f32
    %27 = vector.broadcast %cst_16 : f32 to vector<8x128xf32>
    %28 = arith.maximumf %26, %27 : vector<8x128xf32>
    %c0_17 = arith.constant 0 : index
    %c128_18 = arith.constant 128 : index
    %29 = vector.load %arg3[%c0_17, %c128_18] : memref<128x256xbf16, #tpu.memory_space<vmem>>, vector<128x128xbf16>
    %cst_19 = arith.constant dense<0.000000e+00> : vector<8x128xf32>
    %30 = tpu.matmul %21, %29, %cst_19 {dimension_numbers = #tpu.dot_dimension_numbers<[1], [0], [0], [1], [0, 0, 1, 1], [], []>} : vector<8x128xbf16>, vector<128x128xbf16>, vector<8x128xf32> -> vector<8x128xf32>
    %31 = arith.addf %28, %30 : vector<8x128xf32>
    %32 = arith.truncf %31 : vector<8x128xf32> to vector<8x128xbf16>
    %c0_20 = arith.constant 0 : index
    %c384 = arith.constant 384 : index
    %33 = vector.load %arg2[%c0_20, %c384] : memref<128x512xbf16, #tpu.memory_space<vmem>>, vector<128x128xbf16>
    %cst_21 = arith.constant dense<0.000000e+00> : vector<8x128xf32>
    %34 = tpu.matmul %32, %33, %cst_21 {dimension_numbers = #tpu.dot_dimension_numbers<[1], [0], [0], [1], [0, 0, 1, 1], [], []>} : vector<8x128xbf16>, vector<128x128xbf16>, vector<8x128xf32> -> vector<8x128xf32>
    %c3 = arith.constant 3 : index
    %c0_22 = arith.constant 0 : index
    %35 = vector.load %arg4[%c3, %c0_22] : memref<8x128xf32, #tpu.memory_space<vmem>>, vector<1x128xf32>
    %36 = vector.broadcast %35 : vector<1x128xf32> to vector<8x128xf32>
    %37 = arith.addf %34, %36 : vector<8x128xf32>
    %c0_23 = arith.constant 0 : index
    %c0_24 = arith.constant 0 : index
    %38 = vector.load %arg5[%c0_23, %c0_24] : memref<8x128xf32, #tpu.memory_space<vmem>>, vector<8x128xf32>
    tpu.vector_store %arg5[%c0_23, %c0_24], %37 {strides = array<i32>} : memref<8x128xf32, #tpu.memory_space<vmem>>, vector<8x128xf32>,
    return
  }
  func.func @transform_0(%arg0: i32) -> (i32, i32) {
    %c0_i32 = arith.constant 0 : i32
    %c0_i32_0 = arith.constant 0 : i32
    return %arg0, %c0_i32 : i32, i32
  }
  func.func @transform_1(%arg0: i32) -> (i32, i32) {
    %c0_i32 = arith.constant 0 : i32
    %c0_i32_0 = arith.constant 0 : i32
    %c0_i32_1 = arith.constant 0 : i32
    return %c0_i32, %c0_i32_0 : i32, i32
  }
  func.func @transform_2(%arg0: i32) -> (i32, i32) {
    %c0_i32 = arith.constant 0 : i32
    %c0_i32_0 = arith.constant 0 : i32
    %c0_i32_1 = arith.constant 0 : i32
    return %c0_i32, %c0_i32_0 : i32, i32
  }
  func.func @transform_3(%arg0: i32) -> (i32, i32) {
    %c0_i32 = arith.constant 0 : i32
    %c0_i32_0 = arith.constant 0 : i32
    %c0_i32_1 = arith.constant 0 : i32
    return %c0_i32, %c0_i32_0 : i32, i32
  }
  func.func @transform_4(%arg0: i32) -> (i32, i32) {
    %c0_i32 = arith.constant 0 : i32
    %c0_i32_0 = arith.constant 0 : i32
    return %arg0, %c0_i32 : i32, i32
  }
}

</mosaic_0001>

<llo_original>
// kernel: residual_network_forward.1
$region0: #{residual_network_forward.1}
  #allocation0 [shape = 'u32[]', space=smem, size = 0x4, offset = 0x4, fixed_abs, tag = 'smem constant byte address 0x4 - core index']
  #allocation1 [shape = 'u32[144,128]{1,0:T(1,128)}', space=vmem, size = 0x12000, scoped, tag = 'internal scratch']
  %s0 = inlined_call_operand.vmem [shape: f32[8,128], index: 0, kind: input, shape index: {}]
  %s1 = inlined_call_operand.hbm [shape: bf16[128,512], index: 1, kind: input, shape index: {}]
  %s2 = inlined_call_operand.hbm [shape: bf16[128,256], index: 2, kind: input, shape index: {}]
  %s3 = inlined_call_operand.vmem [shape: f32[8,128], index: 3, kind: input, shape index: {}]
  %s4 = inlined_call_operand.hbm [shape: f32[8,128], index: 4, kind: output, shape index: {}]
  %s5 = sld [smem:[#allocation0]]
  $region34: #{residual_network_forward.1} parent=0
    _
  %s7 = ssub.s32 1, %s5
  %s8 = scalar_select 0, %s7, %s5
  $region1: #{residual_network_forward.1} parent=0
    #allocation2 [shape = 'u8[131072]{0}', space=vmem, size = 0x20000, scoped, tag = 'input window, operand 1, single buffered']
    #allocation3 [shape = 's32[1]{0}', space=sflag, size = 0x4, scoped, tag = 'scoped memory for residual_network_forward.1']
    #allocation4 [shape = 's32[1]{0}', space=sflag, size = 0x4, scoped, tag = 'scoped memory for residual_network_forward.1']
    #allocation5 [shape = 'u8[65536]{0}', space=vmem, size = 0x10000, scoped, tag = 'input window, operand 2, single buffered']
    #allocation6 [shape = 's32[1]{0}', space=sflag, size = 0x4, scoped, tag = 'scoped memory for residual_network_forward.1']
    #allocation7 [shape = 'u8[4096]{0}', space=vmem, size = 0x1000, scoped, tag = 'output window, operand 0, single buffered']
    %9 = vsyncpa [#allocation3], 0
    %10 = vsyncpa [#allocation6], 0
    %11 = vsyncpa [#allocation4], 0
    // Predicated region
    $region2: #{residual_network_forward.1} parent=1 // pred_check
      _
    $region3: #{residual_network_forward.1} parent=1 // pred_check_branch
      %13 = sbr.rel (0) target = $region5
    $region4: #{residual_network_forward.1} parent=1 // pred_region
      _
    $region5: #{residual_network_forward.1} parent=1 // pred_fallthru
      _
    // Predicated region
    $region6: #{residual_network_forward.1} parent=1 // pred_check
      _
    $region7: #{residual_network_forward.1} parent=1 // pred_check_branch
      %15 = sbr.rel (0) target = $region9
    $region8: #{residual_network_forward.1} parent=1 // pred_region
      %s17 = ssub.s32 4096, 4096
      %18 = vsyncadd [#allocation3], %s17
      %s19 = sshll.u32 [#allocation2], 4
      %s20 = int_to_ptr.vmem [resolvable:$true] %s19
      %25 = dma.hbm_to_vmem [thread:$0]  %s1, 4096, %s20, [#allocation3], 256, 256, 16
    $region9: #{residual_network_forward.1} parent=1 // pred_fallthru
      _
    // Predicated region
    $region10: #{residual_network_forward.1} parent=1 // pred_check
      _
    $region11: #{residual_network_forward.1} parent=1 // pred_check_branch
      %27 = sbr.rel (0) target = $region13
    $region12: #{residual_network_forward.1} parent=1 // pred_region
      %s29 = ssub.s32 2048, 2048
      %30 = vsyncadd [#allocation6], %s29
      %s31 = sshll.u32 [#allocation5], 4
      %s32 = int_to_ptr.vmem [resolvable:$true] %s31
      %37 = dma.hbm_to_vmem [thread:$0]  %s2, 2048, %s32, [#allocation6], 128, 128, 8
    $region13: #{residual_network_forward.1} parent=1 // pred_fallthru
      _
    // Predicated region
    $region14: #{residual_network_forward.1} parent=1 // pred_check
      _
    $region15: #{residual_network_forward.1} parent=1 // pred_check_branch
      %39 = sbr.rel (0) target = $region17
    $region16: #{residual_network_forward.1} parent=1 // pred_region
      _
    $region17: #{residual_network_forward.1} parent=1 // pred_fallthru
      _
    // Predicated region
    $region18: #{residual_network_forward.1} parent=1 // pred_check
      _
    $region19: #{residual_network_forward.1} parent=1 // pred_check_branch
      %41 = sbr.rel (0) target = $region21
    $region20: #{residual_network_forward.1} parent=1 // pred_region
      %42 = dma.done [#allocation3], 4096
    $region21: #{residual_network_forward.1} parent=1 // pred_fallthru
      _
    // Predicated region
    $region22: #{residual_network_forward.1} parent=1 // pred_check
      _
    $region23: #{residual_network_forward.1} parent=1 // pred_check_branch
      %44 = sbr.rel (0) target = $region25
    $region24: #{residual_network_forward.1} parent=1 // pred_region
      %45 = dma.done [#allocation6], 2048
    $region25: #{residual_network_forward.1} parent=1 // pred_fallthru
      _
    %v47 = vld [vmem:[%s0] sm:$0xff]
    %v48 = vpack.c.bf16 %v47, %v47
    %v49 = vld [vmem:[#allocation2] sm:$0xf]
    %v50 = vld [vmem:[#allocation2 + $0x10] sm:$0xf]
    %v51 = vld [vmem:[#allocation2 + $0x20] sm:$0xf]
    %v52 = vld [vmem:[#allocation2 + $0x30] sm:$0xf]
    %v53 = vld [vmem:[#allocation2 + $0x40] sm:$0xf]
    %v54 = vld [vmem:[#allocation2 + $0x50] sm:$0xf]
    %v55 = vld [vmem:[#allocation2 + $0x60] sm:$0xf]
    %v56 = vld [vmem:[#allocation2 + $0x70] sm:$0xf]
    %v57 = vld [vmem:[#allocation2 + $0x80] sm:$0xf]
    %v58 = vld [vmem:[#allocation2 + $0x90] sm:$0xf]
    %v59 = vld [vmem:[#allocation2 + $0xa0] sm:$0xf]
    %v60 = vld [vmem:[#allocation2 + $0xb0] sm:$0xf]
    %v61 = vld [vmem:[#allocation2 + $0xc0] sm:$0xf]
    %v62 = vld [vmem:[#allocation2 + $0xd0] sm:$0xf]
    %v63 = vld [vmem:[#allocation2 + $0xe0] sm:$0xf]
    %v64 = vld [vmem:[#allocation2 + $0xf0] sm:$0xf]
    %v65 = vld [vmem:[%s3] sm:$0x1]
    %v66 = vlaneseq
    %v67 = vshrl.u32 %v66, 7
    %v68 = vsub.s32 0, %v67
    %v69 = vrot.slane %v65, %v68
    %v86 = vunpack.c.l.b16 %v49
    %v87 = vunpack.c.l.b16 %v50
    %v88 = vunpack.c.l.b16 %v51
    %v89 = vunpack.c.l.b16 %v52
    %v90 = vunpack.c.l.b16 %v53
    %v91 = vunpack.c.l.b16 %v54
    %v92 = vunpack.c.l.b16 %v55
    %v93 = vunpack.c.l.b16 %v56
    %v94 = vunpack.c.l.b16 %v57
    %v95 = vunpack.c.l.b16 %v58
    %v96 = vunpack.c.l.b16 %v59
    %v97 = vunpack.c.l.b16 %v60
    %v98 = vunpack.c.l.b16 %v61
    %v99 = vunpack.c.l.b16 %v62
    %v100 = vunpack.c.l.b16 %v63
    %v101 = vunpack.c.l.b16 %v64
    %v102 = vpack.c.b16 %v87, %v86
    %v103 = vpack.c.b16 %v89, %v88
    %v104 = vpack.c.b16 %v91, %v90
    %v105 = vpack.c.b16 %v93, %v92
    %v106 = vpack.c.b16 %v95, %v94
    %v107 = vpack.c.b16 %v97, %v96
    %v108 = vpack.c.b16 %v99, %v98
    %v109 = vpack.c.b16 %v101, %v100
    %118 = vmatprep.subr.bf16.mxu0 0
    %119 = vmatpush1.bf16.msra.mxu0 %v102
    %120 = vmatprep.subr.bf16.mxu0 0
    %121 = vmatpush1.bf16.msra.mxu0 %v103
    %122 = vmatprep.subr.bf16.mxu0 0
    %123 = vmatpush1.bf16.msra.mxu0 %v104
    %124 = vmatprep.subr.bf16.mxu0 0
    %125 = vmatpush1.bf16.msra.mxu0 %v105
    %126 = vmatprep.subr.bf16.mxu0 0
    %127 = vmatpush1.bf16.msra.mxu0 %v106
    %128 = vmatprep.subr.bf16.mxu0 0
    %129 = vmatpush1.bf16.msra.mxu0 %v107
    %130 = vmatprep.subr.bf16.mxu0 0
    %131 = vmatpush1.bf16.msra.mxu0 %v108
    %132 = vmatprep.subr.bf16.mxu0 0
    %133 = vmatpush1.bf16.msra.mxu0 %v109
    %134 = vmatprep.subr.bf16.mxu0 0
    %135 = vmatpush1.bf16.msra.mxu0 0
    %136 = vmatprep.subr.bf16.mxu0 0
    %137 = vmatpush1.bf16.msra.mxu0 0
    %138 = vmatprep.subr.bf16.mxu0 0
    %139 = vmatpush1.bf16.msra.mxu0 0
    %140 = vmatprep.subr.bf16.mxu0 0
    %141 = vmatpush1.bf16.msra.mxu0 0
    %142 = vmatprep.subr.bf16.mxu0 0
    %143 = vmatpush1.bf16.msra.mxu0 0
    %144 = vmatprep.subr.bf16.mxu0 0
    %145 = vmatpush1.bf16.msra.mxu0 0
    %146 = vmatprep.subr.bf16.mxu0 0
    %147 = vmatpush1.bf16.msra.mxu0 0
    %148 = vmatprep.subr.bf16.mxu0 0
    %149 = vmatpush1.bf16.msra.mxu0 0
    %150 = vmatprep.mubr.bf16.mxu0 0
    %151 = vmatmul.mubr.bf16.gmra.mrb[0].mxu0 %v48
    %v152 = vpop.f32.mrb[0].mxu0
    %v153 = vadd.f32 %v69, %v152
    %v154 = vpop.f32.mrb[0].mxu0
    %v155 = vpop.f32.mrb[0].mxu0
    %v156 = vpop.f32.mrb[0].mxu0
    %157 = vdwg.mxu0
    %v158 = vmax.f32 %v153, 0.0
    %v159 = vld [vmem:[#allocation5] sm:$0xf]
    %v160 = vld [vmem:[#allocation5 + $0x8] sm:$0xf]
    %v161 = vld [vmem:[#allocation5 + $0x10] sm:$0xf]
    %v162 = vld [vmem:[#allocation5 + $0x18] sm:$0xf]
    %v163 = vld [vmem:[#allocation5 + $0x20] sm:$0xf]
    %v164 = vld [vmem:[#allocation5 + $0x28] sm:$0xf]
    %v165 = vld [vmem:[#allocation5 + $0x30] sm:$0xf]
    %v166 = vld [vmem:[#allocation5 + $0x38] sm:$0xf]
    %v167 = vld [vmem:[#allocation5 + $0x40] sm:$0xf]
    %v168 = vld [vmem:[#allocation5 + $0x48] sm:$0xf]
    %v169 = vld [vmem:[#allocation5 + $0x50] sm:$0xf]
    %v170 = vld [vmem:[#allocation5 + $0x58] sm:$0xf]
    %v171 = vld [vmem:[#allocation5 + $0x60] sm:$0xf]
    %v172 = vld [vmem:[#allocation5 + $0x68] sm:$0xf]
    %v173 = vld [vmem:[#allocation5 + $0x70] sm:$0xf]
    %v174 = vld [vmem:[#allocation5 + $0x78] sm:$0xf]
    %v191 = vunpack.c.l.b16 %v159
    %v192 = vunpack.c.l.b16 %v160
    %v193 = vunpack.c.l.b16 %v161
    %v194 = vunpack.c.l.b16 %v162
    %v195 = vunpack.c.l.b16 %v163
    %v196 = vunpack.c.l.b16 %v164
    %v197 = vunpack.c.l.b16 %v165
    %v198 = vunpack.c.l.b16 %v166
    %v199 = vunpack.c.l.b16 %v167
    %v200 = vunpack.c.l.b16 %v168
    %v201 = vunpack.c.l.b16 %v169
    %v202 = vunpack.c.l.b16 %v170
    %v203 = vunpack.c.l.b16 %v171
    %v204 = vunpack.c.l.b16 %v172
    %v205 = vunpack.c.l.b16 %v173
    %v206 = vunpack.c.l.b16 %v174
    %v207 = vpack.c.b16 %v192, %v191
    %v208 = vpack.c.b16 %v194, %v193
    %v209 = vpack.c.b16 %v196, %v195
    %v210 = vpack.c.b16 %v198, %v197
    %v211 = vpack.c.b16 %v200, %v199
    %v212 = vpack.c.b16 %v202, %v201
    %v213 = vpack.c.b16 %v204, %v203
    %v214 = vpack.c.b16 %v206, %v205
    %223 = vmatprep.subr.bf16.mxu0 0
    %224 = vmatpush1.bf16.msra.mxu0 %v207
    %225 = vmatprep.subr.bf16.mxu0 0
    %226 = vmatpush1.bf16.msra.mxu0 %v208
    %227 = vmatprep.subr.bf16.mxu0 0
    %228 = vmatpush1.bf16.msra.mxu0 %v209
    %229 = vmatprep.subr.bf16.mxu0 0
    %230 = vmatpush1.bf16.msra.mxu0 %v210
    %231 = vmatprep.subr.bf16.mxu0 0
    %232 = vmatpush1.bf16.msra.mxu0 %v211
    %233 = vmatprep.subr.bf16.mxu0 0
    %234 = vmatpush1.bf16.msra.mxu0 %v212
    %235 = vmatprep.subr.bf16.mxu0 0
    %236 = vmatpush1.bf16.msra.mxu0 %v213
    %237 = vmatprep.subr.bf16.mxu0 0
    %238 = vmatpush1.bf16.msra.mxu0 %v214
    %239 = vmatprep.subr.bf16.mxu0 0
    %240 = vmatpush1.bf16.msra.mxu0 0
    %241 = vmatprep.subr.bf16.mxu0 0
    %242 = vmatpush1.bf16.msra.mxu0 0
    %243 = vmatprep.subr.bf16.mxu0 0
    %244 = vmatpush1.bf16.msra.mxu0 0
    %245 = vmatprep.subr.bf16.mxu0 0
    %246 = vmatpush1.bf16.msra.mxu0 0
    %247 = vmatprep.subr.bf16.mxu0 0
    %248 = vmatpush1.bf16.msra.mxu0 0
    %249 = vmatprep.subr.bf16.mxu0 0
    %250 = vmatpush1.bf16.msra.mxu0 0
    %251 = vmatprep.subr.bf16.mxu0 0
    %252 = vmatpush1.bf16.msra.mxu0 0
    %253 = vmatprep.subr.bf16.mxu0 0
    %254 = vmatpush1.bf16.msra.mxu0 0
    %255 = vmatprep.mubr.bf16.mxu0 0
    %256 = vmatmul.mubr.bf16.gmra.mrb[0].mxu0 %v48
    %v257 = vpop.f32.mrb[0].mxu0
    %v258 = vadd.f32 0.0, %v257
    %v259 = vpop.f32.mrb[0].mxu0
    %v260 = vpop.f32.mrb[0].mxu0
    %v261 = vpop.f32.mrb[0].mxu0
    %262 = vdwg.mxu0
    %v263 = vadd.f32 %v158, %v258
    %v264 = vpack.c.bf16 %v263, %v263
    %v265 = vld [vmem:[#allocation2 + $0x4] sm:$0xf]
    %v266 = vld [vmem:[#allocation2 + $0x14] sm:$0xf]
    %v267 = vld [vmem:[#allocation2 + $0x24] sm:$0xf]
    %v268 = vld [vmem:[#allocation2 + $0x34] sm:$0xf]
    %v269 = vld [vmem:[#allocation2 + $0x44] sm:$0xf]
    %v270 = vld [vmem:[#allocation2 + $0x54] sm:$0xf]
    %v271 = vld [vmem:[#allocation2 + $0x64] sm:$0xf]
    %v272 = vld [vmem:[#allocation2 + $0x74] sm:$0xf]
    %v273 = vld [vmem:[#allocation2 + $0x84] sm:$0xf]
    %v274 = vld [vmem:[#allocation2 + $0x94] sm:$0xf]
    %v275 = vld [vmem:[#allocation2 + $0xa4] sm:$0xf]
    %v276 = vld [vmem:[#allocation2 + $0xb4] sm:$0xf]
    %v277 = vld [vmem:[#allocation2 + $0xc4] sm:$0xf]
    %v278 = vld [vmem:[#allocation2 + $0xd4] sm:$0xf]
    %v279 = vld [vmem:[#allocation2 + $0xe4] sm:$0xf]
    %v280 = vld [vmem:[#allocation2 + $0xf4] sm:$0xf]
    %v281 = vld [vmem:[%s3 + $0x1] sm:$0x1]
    %v282 = vlaneseq
    %v283 = vshrl.u32 %v282, 7
    %v284 = vsub.s32 0, %v283
    %v285 = vrot.slane %v281, %v284
    %v302 = vunpack.c.l.b16 %v265
    %v303 = vunpack.c.l.b16 %v266
    %v304 = vunpack.c.l.b16 %v267
    %v305 = vunpack.c.l.b16 %v268
    %v306 = vunpack.c.l.b16 %v269
    %v307 = vunpack.c.l.b16 %v270
    %v308 = vunpack.c.l.b16 %v271
    %v309 = vunpack.c.l.b16 %v272
    %v310 = vunpack.c.l.b16 %v273
    %v311 = vunpack.c.l.b16 %v274
    %v312 = vunpack.c.l.b16 %v275
    %v313 = vunpack.c.l.b16 %v276
    %v314 = vunpack.c.l.b16 %v277
    %v315 = vunpack.c.l.b16 %v278
    %v316 = vunpack.c.l.b16 %v279
    %v317 = vunpack.c.l.b16 %v280
    %v318 = vpack.c.b16 %v303, %v302
    %v319 = vpack.c.b16 %v305, %v304
    %v320 = vpack.c.b16 %v307, %v306
    %v321 = vpack.c.b16 %v309, %v308
    %v322 = vpack.c.b16 %v311, %v310
    %v323 = vpack.c.b16 %v313, %v312
    %v324 = vpack.c.b16 %v315, %v314
    %v325 = vpack.c.b16 %v317, %v316
    %334 = vmatprep.subr.bf16.mxu0 0
    %335 = vmatpush1.bf16.msra.mxu0 %v318
    %336 = vmatprep.subr.bf16.mxu0 0
    %337 = vmatpush1.bf16.msra.mxu0 %v319
    %338 = vmatprep.subr.bf16.mxu0 0
    %339 = vmatpush1.bf16.msra.mxu0 %v320
    %340 = vmatprep.subr.bf16.mxu0 0
    %341 = vmatpush1.bf16.msra.mxu0 %v321
    %342 = vmatprep.subr.bf16.mxu0 0
    %343 = vmatpush1.bf16.msra.mxu0 %v322
    %344 = vmatprep.subr.bf16.mxu0 0
    %345 = vmatpush1.bf16.msra.mxu0 %v323
    %346 = vmatprep.subr.bf16.mxu0 0
    %347 = vmatpush1.bf16.msra.mxu0 %v324
    %348 = vmatprep.subr.bf16.mxu0 0
    %349 = vmatpush1.bf16.msra.mxu0 %v325
    %350 = vmatprep.subr.bf16.mxu0 0
    %351 = vmatpush1.bf16.msra.mxu0 0
    %352 = vmatprep.subr.bf16.mxu0 0
    %353 = vmatpush1.bf16.msra.mxu0 0
    %354 = vmatprep.subr.bf16.mxu0 0
    %355 = vmatpush1.bf16.msra.mxu0 0
    %356 = vmatprep.subr.bf16.mxu0 0
    %357 = vmatpush1.bf16.msra.mxu0 0
    %358 = vmatprep.subr.bf16.mxu0 0
    %359 = vmatpush1.bf16.msra.mxu0 0
    %360 = vmatprep.subr.bf16.mxu0 0
    %361 = vmatpush1.bf16.msra.mxu0 0
    %362 = vmatprep.subr.bf16.mxu0 0
    %363 = vmatpush1.bf16.msra.mxu0 0
    %364 = vmatprep.subr.bf16.mxu0 0
    %365 = vmatpush1.bf16.msra.mxu0 0
    %366 = vmatprep.mubr.bf16.mxu0 0
    %367 = vmatmul.mubr.bf16.gmra.mrb[0].mxu0 %v264
    %v368 = vpop.f32.mrb[0].mxu0
    %v369 = vadd.f32 %v285, %v368
    %v370 = vpop.f32.mrb[0].mxu0
    %v371 = vpop.f32.mrb[0].mxu0
    %v372 = vpop.f32.mrb[0].mxu0
    %373 = vdwg.mxu0
    %v374 = vmax.f32 %v369, 0.0
    %v375 = vadd.f32 %v374, %v263
    %v376 = vpack.c.bf16 %v375, %v375
    %v377 = vld [vmem:[#allocation2 + $0x8] sm:$0xf]
    %v378 = vld [vmem:[#allocation2 + $0x18] sm:$0xf]
    %v379 = vld [vmem:[#allocation2 + $0x28] sm:$0xf]
    %v380 = vld [vmem:[#allocation2 + $0x38] sm:$0xf]
    %v381 = vld [vmem:[#allocation2 + $0x48] sm:$0xf]
    %v382 = vld [vmem:[#allocation2 + $0x58] sm:$0xf]
    %v383 = vld [vmem:[#allocation2 + $0x68] sm:$0xf]
    %v384 = vld [vmem:[#allocation2 + $0x78] sm:$0xf]
    %v385 = vld [vmem:[#allocation2 + $0x88] sm:$0xf]
    %v386 = vld [vmem:[#allocation2 + $0x98] sm:$0xf]
    %v387 = vld [vmem:[#allocation2 + $0xa8] sm:$0xf]
    %v388 = vld [vmem:[#allocation2 + $0xb8] sm:$0xf]
    %v389 = vld [vmem:[#allocation2 + $0xc8] sm:$0xf]
    %v390 = vld [vmem:[#allocation2 + $0xd8] sm:$0xf]
    %v391 = vld [vmem:[#allocation2 + $0xe8] sm:$0xf]
    %v392 = vld [vmem:[#allocation2 + $0xf8] sm:$0xf]
    %v393 = vld [vmem:[%s3 + $0x2] sm:$0x1]
    %v394 = vlaneseq
    %v395 = vshrl.u32 %v394, 7
    %v396 = vsub.s32 0, %v395
    %v397 = vrot.slane %v393, %v396
    %v414 = vunpack.c.l.b16 %v377
    %v415 = vunpack.c.l.b16 %v378
    %v416 = vunpack.c.l.b16 %v379
    %v417 = vunpack.c.l.b16 %v380
    %v418 = vunpack.c.l.b16 %v381
    %v419 = vunpack.c.l.b16 %v382
    %v420 = vunpack.c.l.b16 %v383
    %v421 = vunpack.c.l.b16 %v384
    %v422 = vunpack.c.l.b16 %v385
    %v423 = vunpack.c.l.b16 %v386
    %v424 = vunpack.c.l.b16 %v387
    %v425 = vunpack.c.l.b16 %v388
    %v426 = vunpack.c.l.b16 %v389
    %v427 = vunpack.c.l.b16 %v390
    %v428 = vunpack.c.l.b16 %v391
    %v429 = vunpack.c.l.b16 %v392
    %v430 = vpack.c.b16 %v415, %v414
    %v431 = vpack.c.b16 %v417, %v416
    %v432 = vpack.c.b16 %v419, %v418
    %v433 = vpack.c.b16 %v421, %v420
    %v434 = vpack.c.b16 %v423, %v422
    %v435 = vpack.c.b16 %v425, %v424
    %v436 = vpack.c.b16 %v427, %v426
    %v437 = vpack.c.b16 %v429, %v428
    %446 = vmatprep.subr.bf16.mxu0 0
    %447 = vmatpush1.bf16.msra.mxu0 %v430
    %448 = vmatprep.subr.bf16.mxu0 0
    %449 = vmatpush1.bf16.msra.mxu0 %v431
    %450 = vmatprep.subr.bf16.mxu0 0
    %451 = vmatpush1.bf16.msra.mxu0 %v432
    %452 = vmatprep.subr.bf16.mxu0 0
    %453 = vmatpush1.bf16.msra.mxu0 %v433
    %454 = vmatprep.subr.bf16.mxu0 0
    %455 = vmatpush1.bf16.msra.mxu0 %v434
    %456 = vmatprep.subr.bf16.mxu0 0
    %457 = vmatpush1.bf16.msra.mxu0 %v435
    %458 = vmatprep.subr.bf16.mxu0 0
    %459 = vmatpush1.bf16.msra.mxu0 %v436
    %460 = vmatprep.subr.bf16.mxu0 0
    %461 = vmatpush1.bf16.msra.mxu0 %v437
    %462 = vmatprep.subr.bf16.mxu0 0
    %463 = vmatpush1.bf16.msra.mxu0 0
    %464 = vmatprep.subr.bf16.mxu0 0
    %465 = vmatpush1.bf16.msra.mxu0 0
    %466 = vmatprep.subr.bf16.mxu0 0
    %467 = vmatpush1.bf16.msra.mxu0 0
    %468 = vmatprep.subr.bf16.mxu0 0
    %469 = vmatpush1.bf16.msra.mxu0 0
    %470 = vmatprep.subr.bf16.mxu0 0
    %471 = vmatpush1.bf16.msra.mxu0 0
    %472 = vmatprep.subr.bf16.mxu0 0
    %473 = vmatpush1.bf16.msra.mxu0 0
    %474 = vmatprep.subr.bf16.mxu0 0
    %475 = vmatpush1.bf16.msra.mxu0 0
    %476 = vmatprep.subr.bf16.mxu0 0
    %477 = vmatpush1.bf16.msra.mxu0 0
    %478 = vmatprep.mubr.bf16.mxu0 0
    %479 = vmatmul.mubr.bf16.gmra.mrb[0].mxu0 %v376
    %v480 = vpop.f32.mrb[0].mxu0
    %v481 = vadd.f32 %v397, %v480
    %v482 = vpop.f32.mrb[0].mxu0
    %v483 = vpop.f32.mrb[0].mxu0
    %v484 = vpop.f32.mrb[0].mxu0
    %485 = vdwg.mxu0
    %v486 = vmax.f32 %v481, 0.0
    %v487 = vld [vmem:[#allocation5 + $0x4] sm:$0xf]
    %v488 = vld [vmem:[#allocation5 + $0xc] sm:$0xf]
    %v489 = vld [vmem:[#allocation5 + $0x14] sm:$0xf]
    %v490 = vld [vmem:[#allocation5 + $0x1c] sm:$0xf]
    %v491 = vld [vmem:[#allocation5 + $0x24] sm:$0xf]
    %v492 = vld [vmem:[#allocation5 + $0x2c] sm:$0xf]
    %v493 = vld [vmem:[#allocation5 + $0x34] sm:$0xf]
    %v494 = vld [vmem:[#allocation5 + $0x3c] sm:$0xf]
    %v495 = vld [vmem:[#allocation5 + $0x44] sm:$0xf]
    %v496 = vld [vmem:[#allocation5 + $0x4c] sm:$0xf]
    %v497 = vld [vmem:[#allocation5 + $0x54] sm:$0xf]
    %v498 = vld [vmem:[#allocation5 + $0x5c] sm:$0xf]
    %v499 = vld [vmem:[#allocation5 + $0x64] sm:$0xf]
    %v500 = vld [vmem:[#allocation5 + $0x6c] sm:$0xf]
    %v501 = vld [vmem:[#allocation5 + $0x74] sm:$0xf]
    %v502 = vld [vmem:[#allocation5 + $0x7c] sm:$0xf]
    %v519 = vunpack.c.l.b16 %v487
    %v520 = vunpack.c.l.b16 %v488
    %v521 = vunpack.c.l.b16 %v489
    %v522 = vunpack.c.l.b16 %v490
    %v523 = vunpack.c.l.b16 %v491
    %v524 = vunpack.c.l.b16 %v492
    %v525 = vunpack.c.l.b16 %v493
    %v526 = vunpack.c.l.b16 %v494
    %v527 = vunpack.c.l.b16 %v495
    %v528 = vunpack.c.l.b16 %v496
    %v529 = vunpack.c.l.b16 %v497
    %v530 = vunpack.c.l.b16 %v498
    %v531 = vunpack.c.l.b16 %v499
    %v532 = vunpack.c.l.b16 %v500
    %v533 = vunpack.c.l.b16 %v501
    %v534 = vunpack.c.l.b16 %v502
    %v535 = vpack.c.b16 %v520, %v519
    %v536 = vpack.c.b16 %v522, %v521
    %v537 = vpack.c.b16 %v524, %v523
    %v538 = vpack.c.b16 %v526, %v525
    %v539 = vpack.c.b16 %v528, %v527
    %v540 = vpack.c.b16 %v530, %v529
    %v541 = vpack.c.b16 %v532, %v531
    %v542 = vpack.c.b16 %v534, %v533
    %551 = vmatprep.subr.bf16.mxu0 0
    %552 = vmatpush1.bf16.msra.mxu0 %v535
    %553 = vmatprep.subr.bf16.mxu0 0
    %554 = vmatpush1.bf16.msra.mxu0 %v536
    %555 = vmatprep.subr.bf16.mxu0 0
    %556 = vmatpush1.bf16.msra.mxu0 %v537
    %557 = vmatprep.subr.bf16.mxu0 0
    %558 = vmatpush1.bf16.msra.mxu0 %v538
    %559 = vmatprep.subr.bf16.mxu0 0
    %560 = vmatpush1.bf16.msra.mxu0 %v539
    %561 = vmatprep.subr.bf16.mxu0 0
    %562 = vmatpush1.bf16.msra.mxu0 %v540
    %563 = vmatprep.subr.bf16.mxu0 0
    %564 = vmatpush1.bf16.msra.mxu0 %v541
    %565 = vmatprep.subr.bf16.mxu0 0
    %566 = vmatpush1.bf16.msra.mxu0 %v542
    %567 = vmatprep.subr.bf16.mxu0 0
    %568 = vmatpush1.bf16.msra.mxu0 0
    %569 = vmatprep.subr.bf16.mxu0 0
    %570 = vmatpush1.bf16.msra.mxu0 0
    %571 = vmatprep.subr.bf16.mxu0 0
    %572 = vmatpush1.bf16.msra.mxu0 0
    %573 = vmatprep.subr.bf16.mxu0 0
    %574 = vmatpush1.bf16.msra.mxu0 0
    %575 = vmatprep.subr.bf16.mxu0 0
    %576 = vmatpush1.bf16.msra.mxu0 0
    %577 = vmatprep.subr.bf16.mxu0 0
    %578 = vmatpush1.bf16.msra.mxu0 0
    %579 = vmatprep.subr.bf16.mxu0 0
    %580 = vmatpush1.bf16.msra.mxu0 0
    %581 = vmatprep.subr.bf16.mxu0 0
    %582 = vmatpush1.bf16.msra.mxu0 0
    %583 = vmatprep.mubr.bf16.mxu0 0
    %584 = vmatmul.mubr.bf16.gmra.mrb[0].mxu0 %v376
    %v585 = vpop.f32.mrb[0].mxu0
    %v586 = vadd.f32 0.0, %v585
    %v587 = vpop.f32.mrb[0].mxu0
    %v588 = vpop.f32.mrb[0].mxu0
    %v589 = vpop.f32.mrb[0].mxu0
    %590 = vdwg.mxu0
    %v591 = vadd.f32 %v486, %v586
    %v592 = vpack.c.bf16 %v591, %v591
    %v593 = vld [vmem:[#allocation2 + $0xc] sm:$0xf]
    %v594 = vld [vmem:[#allocation2 + $0x1c] sm:$0xf]
    %v595 = vld [vmem:[#allocation2 + $0x2c] sm:$0xf]
    %v596 = vld [vmem:[#allocation2 + $0x3c] sm:$0xf]
    %v597 = vld [vmem:[#allocation2 + $0x4c] sm:$0xf]
    %v598 = vld [vmem:[#allocation2 + $0x5c] sm:$0xf]
    %v599 = vld [vmem:[#allocation2 + $0x6c] sm:$0xf]
    %v600 = vld [vmem:[#allocation2 + $0x7c] sm:$0xf]
    %v601 = vld [vmem:[#allocation2 + $0x8c] sm:$0xf]
    %v602 = vld [vmem:[#allocation2 + $0x9c] sm:$0xf]
    %v603 = vld [vmem:[#allocation2 + $0xac] sm:$0xf]
    %v604 = vld [vmem:[#allocation2 + $0xbc] sm:$0xf]
    %v605 = vld [vmem:[#allocation2 + $0xcc] sm:$0xf]
    %v606 = vld [vmem:[#allocation2 + $0xdc] sm:$0xf]
    %v607 = vld [vmem:[#allocation2 + $0xec] sm:$0xf]
    %v608 = vld [vmem:[#allocation2 + $0xfc] sm:$0xf]
    %v609 = vld [vmem:[%s3 + $0x3] sm:$0x1]
    %v610 = vlaneseq
    %v611 = vshrl.u32 %v610, 7
    %v612 = vsub.s32 0, %v611
    %v613 = vrot.slane %v609, %v612
    %v630 = vunpack.c.l.b16 %v593
    %v631 = vunpack.c.l.b16 %v594
    %v632 = vunpack.c.l.b16 %v595
    %v633 = vunpack.c.l.b16 %v596
    %v634 = vunpack.c.l.b16 %v597
    %v635 = vunpack.c.l.b16 %v598
    %v636 = vunpack.c.l.b16 %v599
    %v637 = vunpack.c.l.b16 %v600
    %v638 = vunpack.c.l.b16 %v601
    %v639 = vunpack.c.l.b16 %v602
    %v640 = vunpack.c.l.b16 %v603
    %v641 = vunpack.c.l.b16 %v604
    %v642 = vunpack.c.l.b16 %v605
    %v643 = vunpack.c.l.b16 %v606
    %v644 = vunpack.c.l.b16 %v607
    %v645 = vunpack.c.l.b16 %v608
    %v646 = vpack.c.b16 %v631, %v630
    %v647 = vpack.c.b16 %v633, %v632
    %v648 = vpack.c.b16 %v635, %v634
    %v649 = vpack.c.b16 %v637, %v636
    %v650 = vpack.c.b16 %v639, %v638
    %v651 = vpack.c.b16 %v641, %v640
    %v652 = vpack.c.b16 %v643, %v642
    %v653 = vpack.c.b16 %v645, %v644
    %662 = vmatprep.subr.bf16.mxu0 0
    %663 = vmatpush1.bf16.msra.mxu0 %v646
    %664 = vmatprep.subr.bf16.mxu0 0
    %665 = vmatpush1.bf16.msra.mxu0 %v647
    %666 = vmatprep.subr.bf16.mxu0 0
    %667 = vmatpush1.bf16.msra.mxu0 %v648
    %668 = vmatprep.subr.bf16.mxu0 0
    %669 = vmatpush1.bf16.msra.mxu0 %v649
    %670 = vmatprep.subr.bf16.mxu0 0
    %671 = vmatpush1.bf16.msra.mxu0 %v650
    %672 = vmatprep.subr.bf16.mxu0 0
    %673 = vmatpush1.bf16.msra.mxu0 %v651
    %674 = vmatprep.subr.bf16.mxu0 0
    %675 = vmatpush1.bf16.msra.mxu0 %v652
    %676 = vmatprep.subr.bf16.mxu0 0
    %677 = vmatpush1.bf16.msra.mxu0 %v653
    %678 = vmatprep.subr.bf16.mxu0 0
    %679 = vmatpush1.bf16.msra.mxu0 0
    %680 = vmatprep.subr.bf16.mxu0 0
    %681 = vmatpush1.bf16.msra.mxu0 0
    %682 = vmatprep.subr.bf16.mxu0 0
    %683 = vmatpush1.bf16.msra.mxu0 0
    %684 = vmatprep.subr.bf16.mxu0 0
    %685 = vmatpush1.bf16.msra.mxu0 0
    %686 = vmatprep.subr.bf16.mxu0 0
    %687 = vmatpush1.bf16.msra.mxu0 0
    %688 = vmatprep.subr.bf16.mxu0 0
    %689 = vmatpush1.bf16.msra.mxu0 0
    %690 = vmatprep.subr.bf16.mxu0 0
    %691 = vmatpush1.bf16.msra.mxu0 0
    %692 = vmatprep.subr.bf16.mxu0 0
    %693 = vmatpush1.bf16.msra.mxu0 0
    %694 = vmatprep.mubr.bf16.mxu0 0
    %695 = vmatmul.mubr.bf16.gmra.mrb[0].mxu0 %v592
    %v696 = vpop.f32.mrb[0].mxu0
    %v697 = vadd.f32 %v613, %v696
    %v698 = vpop.f32.mrb[0].mxu0
    %v699 = vpop.f32.mrb[0].mxu0
    %v700 = vpop.f32.mrb[0].mxu0
    %701 = vdwg.mxu0
    %702 = vst [vmem:[#allocation7] sm:$0xff] %v697
    // Predicated region
    $region26: #{residual_network_forward.1} parent=1 // pred_check
      _
    $region27: #{residual_network_forward.1} parent=1 // pred_check_branch
      %704 = sbr.rel (0) target = $region29
    $region28: #{residual_network_forward.1} parent=1 // pred_region
      %s706 = ssub.s32 128, 128
      %707 = vsyncadd [#allocation4], %s706
      %s709 = sshll.u32 [#allocation7], 4
      %s710 = int_to_ptr.vmem [resolvable:$true] %s709
      %712 = dma.vmem_to_hbm [thread:$0]  %s710, 128, %s4, [#allocation4]
    $region29: #{residual_network_forward.1} parent=1 // pred_fallthru
      _
    // Predicated region
    $region30: #{residual_network_forward.1} parent=1 // pred_check
      _
    $region31: #{residual_network_forward.1} parent=1 // pred_check_branch
      %714 = sbr.rel (0) target = $region33
    $region32: #{residual_network_forward.1} parent=1 // pred_region
      %715 = dma.done [#allocation4], 128
    $region33: #{residual_network_forward.1} parent=1 // pred_fallthru
      _
    %716 = vsyncpa [#allocation3], 1
    %717 = vsyncpa [#allocation6], 1
    %718 = vsyncpa [#allocation4], 1

</llo_original>
